<compile_context>
chip_gen: v6e
topology: v6e:2x2x1
jax: 0.10.0
libtpu: 0.0.40
codegen_flags: <defaults>
</compile_context>

<pallas_src>
import jax
import jax.numpy as jnp
from jax.experimental import pallas as pl
from jax.experimental.pallas import tpu as pltpu


def _affine_vpu(w, b, x):
    """Compute w @ x + b with batch on the lane axis, on the VPU.

    w: (out, in)   -- tiny, VMEM-resident
    b: (out, 1)
    x: (in, TB)    -- batch tile on the lane axis
    returns (out, TB)
    """
    out_dim, in_dim = w.shape
    tb = x.shape[1]
    acc = jnp.broadcast_to(b, (out_dim, tb))
    # in_dim <= 8: fully unrolled scalar-broadcast FMAs (no MXU fill/drain).
    for k in range(in_dim):
        acc = acc + w[:, k:k + 1] * x[k:k + 1, :]
    return acc


def mlp_kernel(x_ref, w1_ref, b1_ref, w2_ref, b2_ref, w3_ref, b3_ref, o_ref):
    x = x_ref[...]                                   # (8, TB)
    h1 = jnp.maximum(_affine_vpu(w1_ref[...], b1_ref[...], x), 0.0)   # (6, TB)
    h2 = jnp.maximum(_affine_vpu(w2_ref[...], b2_ref[...], h1), 0.0)  # (4, TB)
    y = jax.nn.sigmoid(_affine_vpu(w3_ref[...], b3_ref[...], h2))     # (1, TB)
    o_ref[...] = y                                    # lane-dense store


def mlp_forward(x, w1, b1, w2, b2, w3, b3, *, max_tile=4096):
    """x: (B, 8) f32.  Weights are PyTorch-layout (out, in); biases (out, 1)."""
    B = x.shape[0]
    # Batch tile: multiple of 128 (lane width), capped so VMEM stays small.
    TB = min(max_tile, ((B + 127) // 128) * 128)
    Bp = pl.cdiv(B, TB) * TB

    # Boundary layout transform: batch on the lane axis, padded to a tile multiple.
    x_t = jnp.pad(x.astype(jnp.float32).T, ((0, 0), (0, Bp - B)))     # (8, Bp)

    # Weights/biases: constant block index -> DMA'd once, resident across tiles.
    const = lambda shape: pl.BlockSpec(shape, lambda i: (0, 0))

    y_t = pl.pallas_call(
        mlp_kernel,
        out_shape=jax.ShapeDtypeStruct((1, Bp), jnp.float32),
        grid=(Bp // TB,),
        in_specs=[
            pl.BlockSpec((8, TB), lambda i: (0, i)),   # x tile: batch on lanes
            const(w1.shape), const(b1.shape),
            const(w2.shape), const(b2.shape),
            const(w3.shape), const(b3.shape),
        ],
        out_specs=pl.BlockSpec((1, TB), lambda i: (0, i)),
        compiler_params=pltpu.CompilerParams(
            dimension_semantics=("parallel",),          # shard batch across TCs (v7x)
        ),
    )(x_t, w1, b1, w2, b2, w3, b3)

    return y_t[:, :B].T                                # (B, 1)


def init_params(key):
    # Deterministic init mirroring PyTorch Linear's uniform(-1/sqrt(fan_in), 1/sqrt(fan_in)).
    # Weight layout matches PyTorch: (out_features, in_features); bias: (out_features, 1).
    def linear(k, fan_in, fan_out):
        kw, kb = jax.random.split(k)
        bound = 1.0 / jnp.sqrt(jnp.float32(fan_in))
        w = jax.random.uniform(kw, (fan_out, fan_in), jnp.float32, -bound, bound)
        b = jax.random.uniform(kb, (fan_out, 1), jnp.float32, -bound, bound)
        return w, b

    k1, k2, k3 = jax.random.split(key, 3)
    w1, b1 = linear(k1, 8, 6)
    w2, b2 = linear(k2, 6, 4)
    w3, b3 = linear(k3, 4, 1)
    return w1, b1, w2, b2, w3, b3


if __name__ == "__main__":
    # NOTE: at B=8 this is launch-overhead bound and plain XLA would be faster;
    # the gridded/lane-dense design above is what pays off at large batch.
    key = jax.random.PRNGKey(0)
    k_x, k_p = jax.random.split(key)
    B = 8
    x = jax.random.normal(k_x, (B, 8), jnp.float32)
    w1, b1, w2, b2, w3, b3 = init_params(k_p)

    y = mlp_forward(x, w1, b1, w2, b2, w3, b3)
    y = jax.block_until_ready(y)

    # Pure-JAX reference check (PyTorch semantics: x @ W.T + b).
    h1 = jnp.maximum(x @ w1.T + b1.T, 0.0)
    h2 = jnp.maximum(h1 @ w2.T + b2.T, 0.0)
    y_ref = jax.nn.sigmoid(h2 @ w3.T + b3.T)

    assert y.shape == (B, 1)
    assert jnp.allclose(y, y_ref, atol=1e-5, rtol=1e-5)

    print("KERNEL_OK")
</pallas_src>

<mosaic_0001>
module attributes {stable_mosaic.version = 11 : i64} {
  func.func @mlp_kernel(%arg0: i32, %arg1: memref<8x128xf32, #tpu.memory_space<vmem>>, %arg2: memref<6x8xf32, #tpu.memory_space<vmem>>, %arg3: memref<6x1xf32, #tpu.memory_space<vmem>>, %arg4: memref<4x6xf32, #tpu.memory_space<vmem>>, %arg5: memref<4x1xf32, #tpu.memory_space<vmem>>, %arg6: memref<1x4xf32, #tpu.memory_space<vmem>>, %arg7: memref<1x1xf32, #tpu.memory_space<vmem>>, %arg8: memref<1x128xf32, #tpu.memory_space<vmem>>) attributes {dimension_semantics = [#tpu.dimension_semantics<parallel>], iteration_bounds = array<i64: 1>, scalar_prefetch = 0 : i64, scratch_operands = 0 : i64, tpu.core_type = #tpu.core_type<tc>, window_params = [{transform_indices = @transform_0, window_bounds = array<i64: 8, 128>}, {pipeline_mode = #tpu.pipeline_mode<synchronous>, transform_indices = @transform_1, window_bounds = array<i64: 6, 8>}, {pipeline_mode = #tpu.pipeline_mode<synchronous>, transform_indices = @transform_2, window_bounds = array<i64: 6, 1>}, {pipeline_mode = #tpu.pipeline_mode<synchronous>, transform_indices = @transform_3, window_bounds = array<i64: 4, 6>}, {pipeline_mode = #tpu.pipeline_mode<synchronous>, transform_indices = @transform_4, window_bounds = array<i64: 4, 1>}, {pipeline_mode = #tpu.pipeline_mode<synchronous>, transform_indices = @transform_5, window_bounds = array<i64: 1, 4>}, {pipeline_mode = #tpu.pipeline_mode<synchronous>, transform_indices = @transform_6, window_bounds = array<i64: 1, 1>}, {transform_indices = @transform_7, window_bounds = array<i64: 1, 128>}]} {
    %c0 = arith.constant 0 : index
    %c0_0 = arith.constant 0 : index
    %0 = vector.load %arg1[%c0, %c0_0] : memref<8x128xf32, #tpu.memory_space<vmem>>, vector<8x128xf32>
    %c0_1 = arith.constant 0 : index
    %c0_2 = arith.constant 0 : index
    %1 = vector.load %arg2[%c0_1, %c0_2] : memref<6x8xf32, #tpu.memory_space<vmem>>, vector<6x8xf32>
    %c0_3 = arith.constant 0 : index
    %c0_4 = arith.constant 0 : index
    %2 = vector.load %arg3[%c0_3, %c0_4] : memref<6x1xf32, #tpu.memory_space<vmem>>, vector<6x1xf32>
    %3 = vector.shape_cast %2 : vector<6x1xf32> to vector<6x1xf32>
    %4 = vector.broadcast %3 : vector<6x1xf32> to vector<6x128xf32>
    %5 = vector.extract_strided_slice %1 {offsets = [0, 0], sizes = [6, 1], strides = [1, 1]} : vector<6x8xf32> to vector<6x1xf32>
    %6 = vector.extract_strided_slice %0 {offsets = [0, 0], sizes = [1, 128], strides = [1, 1]} : vector<8x128xf32> to vector<1x128xf32>
    %7 = vector.broadcast %5 : vector<6x1xf32> to vector<6x128xf32>
    %8 = vector.broadcast %6 : vector<1x128xf32> to vector<6x128xf32>
    %9 = arith.mulf %7, %8 : vector<6x128xf32>
    %10 = arith.addf %4, %9 : vector<6x128xf32>
    %11 = vector.extract_strided_slice %1 {offsets = [0, 1], sizes = [6, 1], strides = [1, 1]} : vector<6x8xf32> to vector<6x1xf32>
    %12 = vector.extract_strided_slice %0 {offsets = [1, 0], sizes = [1, 128], strides = [1, 1]} : vector<8x128xf32> to vector<1x128xf32>
    %13 = vector.broadcast %11 : vector<6x1xf32> to vector<6x128xf32>
    %14 = vector.broadcast %12 : vector<1x128xf32> to vector<6x128xf32>
    %15 = arith.mulf %13, %14 : vector<6x128xf32>
    %16 = arith.addf %10, %15 : vector<6x128xf32>
    %17 = vector.extract_strided_slice %1 {offsets = [0, 2], sizes = [6, 1], strides = [1, 1]} : vector<6x8xf32> to vector<6x1xf32>
    %18 = vector.extract_strided_slice %0 {offsets = [2, 0], sizes = [1, 128], strides = [1, 1]} : vector<8x128xf32> to vector<1x128xf32>
    %19 = vector.broadcast %17 : vector<6x1xf32> to vector<6x128xf32>
    %20 = vector.broadcast %18 : vector<1x128xf32> to vector<6x128xf32>
    %21 = arith.mulf %19, %20 : vector<6x128xf32>
    %22 = arith.addf %16, %21 : vector<6x128xf32>
    %23 = vector.extract_strided_slice %1 {offsets = [0, 3], sizes = [6, 1], strides = [1, 1]} : vector<6x8xf32> to vector<6x1xf32>
    %24 = vector.extract_strided_slice %0 {offsets = [3, 0], sizes = [1, 128], strides = [1, 1]} : vector<8x128xf32> to vector<1x128xf32>
    %25 = vector.broadcast %23 : vector<6x1xf32> to vector<6x128xf32>
    %26 = vector.broadcast %24 : vector<1x128xf32> to vector<6x128xf32>
    %27 = arith.mulf %25, %26 : vector<6x128xf32>
    %28 = arith.addf %22, %27 : vector<6x128xf32>
    %29 = vector.extract_strided_slice %1 {offsets = [0, 4], sizes = [6, 1], strides = [1, 1]} : vector<6x8xf32> to vector<6x1xf32>
    %30 = vector.extract_strided_slice %0 {offsets = [4, 0], sizes = [1, 128], strides = [1, 1]} : vector<8x128xf32> to vector<1x128xf32>
    %31 = vector.broadcast %29 : vector<6x1xf32> to vector<6x128xf32>
    %32 = vector.broadcast %30 : vector<1x128xf32> to vector<6x128xf32>
    %33 = arith.mulf %31, %32 : vector<6x128xf32>
    %34 = arith.addf %28, %33 : vector<6x128xf32>
    %35 = vector.extract_strided_slice %1 {offsets = [0, 5], sizes = [6, 1], strides = [1, 1]} : vector<6x8xf32> to vector<6x1xf32>
    %36 = vector.extract_strided_slice %0 {offsets = [5, 0], sizes = [1, 128], strides = [1, 1]} : vector<8x128xf32> to vector<1x128xf32>
    %37 = vector.broadcast %35 : vector<6x1xf32> to vector<6x128xf32>
    %38 = vector.broadcast %36 : vector<1x128xf32> to vector<6x128xf32>
    %39 = arith.mulf %37, %38 : vector<6x128xf32>
    %40 = arith.addf %34, %39 : vector<6x128xf32>
    %41 = vector.extract_strided_slice %1 {offsets = [0, 6], sizes = [6, 1], strides = [1, 1]} : vector<6x8xf32> to vector<6x1xf32>
    %42 = vector.extract_strided_slice %0 {offsets = [6, 0], sizes = [1, 128], strides = [1, 1]} : vector<8x128xf32> to vector<1x128xf32>
    %43 = vector.broadcast %41 : vector<6x1xf32> to vector<6x128xf32>
    %44 = vector.broadcast %42 : vector<1x128xf32> to vector<6x128xf32>
    %45 = arith.mulf %43, %44 : vector<6x128xf32>
    %46 = arith.addf %40, %45 : vector<6x128xf32>
    %47 = vector.extract_strided_slice %1 {offsets = [0, 7], sizes = [6, 1], strides = [1, 1]} : vector<6x8xf32> to vector<6x1xf32>
    %48 = vector.extract_strided_slice %0 {offsets = [7, 0], sizes = [1, 128], strides = [1, 1]} : vector<8x128xf32> to vector<1x128xf32>
    %49 = vector.broadcast %47 : vector<6x1xf32> to vector<6x128xf32>
    %50 = vector.broadcast %48 : vector<1x128xf32> to vector<6x128xf32>
    %51 = arith.mulf %49, %50 : vector<6x128xf32>
    %52 = arith.addf %46, %51 : vector<6x128xf32>
    %cst = arith.constant 0.000000e+00 : f32
    %53 = vector.broadcast %cst : f32 to vector<6x128xf32>
    %54 = arith.maximumf %52, %53 : vector<6x128xf32>
    %c0_5 = arith.constant 0 : index
    %c0_6 = arith.constant 0 : index
    %55 = vector.load %arg4[%c0_5, %c0_6] : memref<4x6xf32, #tpu.memory_space<vmem>>, vector<4x6xf32>
    %c0_7 = arith.constant 0 : index
    %c0_8 = arith.constant 0 : index
    %56 = vector.load %arg5[%c0_7, %c0_8] : memref<4x1xf32, #tpu.memory_space<vmem>>, vector<4x1xf32>
    %57 = vector.shape_cast %56 : vector<4x1xf32> to vector<4x1xf32>
    %58 = vector.broadcast %57 : vector<4x1xf32> to vector<4x128xf32>
    %59 = vector.extract_strided_slice %55 {offsets = [0, 0], sizes = [4, 1], strides = [1, 1]} : vector<4x6xf32> to vector<4x1xf32>
    %60 = vector.extract_strided_slice %54 {offsets = [0, 0], sizes = [1, 128], strides = [1, 1]} : vector<6x128xf32> to vector<1x128xf32>
    %61 = vector.broadcast %59 : vector<4x1xf32> to vector<4x128xf32>
    %62 = vector.broadcast %60 : vector<1x128xf32> to vector<4x128xf32>
    %63 = arith.mulf %61, %62 : vector<4x128xf32>
    %64 = arith.addf %58, %63 : vector<4x128xf32>
    %65 = vector.extract_strided_slice %55 {offsets = [0, 1], sizes = [4, 1], strides = [1, 1]} : vector<4x6xf32> to vector<4x1xf32>
    %66 = vector.extract_strided_slice %54 {offsets = [1, 0], sizes = [1, 128], strides = [1, 1]} : vector<6x128xf32> to vector<1x128xf32>
    %67 = vector.broadcast %65 : vector<4x1xf32> to vector<4x128xf32>
    %68 = vector.broadcast %66 : vector<1x128xf32> to vector<4x128xf32>
    %69 = arith.mulf %67, %68 : vector<4x128xf32>
    %70 = arith.addf %64, %69 : vector<4x128xf32>
    %71 = vector.extract_strided_slice %55 {offsets = [0, 2], sizes = [4, 1], strides = [1, 1]} : vector<4x6xf32> to vector<4x1xf32>
    %72 = vector.extract_strided_slice %54 {offsets = [2, 0], sizes = [1, 128], strides = [1, 1]} : vector<6x128xf32> to vector<1x128xf32>
    %73 = vector.broadcast %71 : vector<4x1xf32> to vector<4x128xf32>
    %74 = vector.broadcast %72 : vector<1x128xf32> to vector<4x128xf32>
    %75 = arith.mulf %73, %74 : vector<4x128xf32>
    %76 = arith.addf %70, %75 : vector<4x128xf32>
    %77 = vector.extract_strided_slice %55 {offsets = [0, 3], sizes = [4, 1], strides = [1, 1]} : vector<4x6xf32> to vector<4x1xf32>
    %78 = vector.extract_strided_slice %54 {offsets = [3, 0], sizes = [1, 128], strides = [1, 1]} : vector<6x128xf32> to vector<1x128xf32>
    %79 = vector.broadcast %77 : vector<4x1xf32> to vector<4x128xf32>
    %80 = vector.broadcast %78 : vector<1x128xf32> to vector<4x128xf32>
    %81 = arith.mulf %79, %80 : vector<4x128xf32>
    %82 = arith.addf %76, %81 : vector<4x128xf32>
    %83 = vector.extract_strided_slice %55 {offsets = [0, 4], sizes = [4, 1], strides = [1, 1]} : vector<4x6xf32> to vector<4x1xf32>
    %84 = vector.extract_strided_slice %54 {offsets = [4, 0], sizes = [1, 128], strides = [1, 1]} : vector<6x128xf32> to vector<1x128xf32>
    %85 = vector.broadcast %83 : vector<4x1xf32> to vector<4x128xf32>
    %86 = vector.broadcast %84 : vector<1x128xf32> to vector<4x128xf32>
    %87 = arith.mulf %85, %86 : vector<4x128xf32>
    %88 = arith.addf %82, %87 : vector<4x128xf32>
    %89 = vector.extract_strided_slice %55 {offsets = [0, 5], sizes = [4, 1], strides = [1, 1]} : vector<4x6xf32> to vector<4x1xf32>
    %90 = vector.extract_strided_slice %54 {offsets = [5, 0], sizes = [1, 128], strides = [1, 1]} : vector<6x128xf32> to vector<1x128xf32>
    %91 = vector.broadcast %89 : vector<4x1xf32> to vector<4x128xf32>
    %92 = vector.broadcast %90 : vector<1x128xf32> to vector<4x128xf32>
    %93 = arith.mulf %91, %92 : vector<4x128xf32>
    %94 = arith.addf %88, %93 : vector<4x128xf32>
    %cst_9 = arith.constant 0.000000e+00 : f32
    %95 = vector.broadcast %cst_9 : f32 to vector<4x128xf32>
    %96 = arith.maximumf %94, %95 : vector<4x128xf32>
    %c0_10 = arith.constant 0 : index
    %c0_11 = arith.constant 0 : index
    %97 = vector.load %arg6[%c0_10, %c0_11] : memref<1x4xf32, #tpu.memory_space<vmem>>, vector<1x4xf32>
    %c0_12 = arith.constant 0 : index
    %c0_13 = arith.constant 0 : index
    %98 = vector.load %arg7[%c0_12, %c0_13] : memref<1x1xf32, #tpu.memory_space<vmem>>, vector<1x1xf32>
    %99 = vector.shape_cast %98 : vector<1x1xf32> to vector<1x1xf32>
    %100 = vector.broadcast %99 : vector<1x1xf32> to vector<1x128xf32>
    %101 = vector.extract_strided_slice %97 {offsets = [0, 0], sizes = [1, 1], strides = [1, 1]} : vector<1x4xf32> to vector<1x1xf32>
    %102 = vector.extract_strided_slice %96 {offsets = [0, 0], sizes = [1, 128], strides = [1, 1]} : vector<4x128xf32> to vector<1x128xf32>
    %103 = vector.broadcast %101 : vector<1x1xf32> to vector<1x128xf32>
    %104 = arith.mulf %103, %102 : vector<1x128xf32>
    %105 = arith.addf %100, %104 : vector<1x128xf32>
    %106 = vector.extract_strided_slice %97 {offsets = [0, 1], sizes = [1, 1], strides = [1, 1]} : vector<1x4xf32> to vector<1x1xf32>
    %107 = vector.extract_strided_slice %96 {offsets = [1, 0], sizes = [1, 128], strides = [1, 1]} : vector<4x128xf32> to vector<1x128xf32>
    %108 = vector.broadcast %106 : vector<1x1xf32> to vector<1x128xf32>
    %109 = arith.mulf %108, %107 : vector<1x128xf32>
    %110 = arith.addf %105, %109 : vector<1x128xf32>
    %111 = vector.extract_strided_slice %97 {offsets = [0, 2], sizes = [1, 1], strides = [1, 1]} : vector<1x4xf32> to vector<1x1xf32>
    %112 = vector.extract_strided_slice %96 {offsets = [2, 0], sizes = [1, 128], strides = [1, 1]} : vector<4x128xf32> to vector<1x128xf32>
    %113 = vector.broadcast %111 : vector<1x1xf32> to vector<1x128xf32>
    %114 = arith.mulf %113, %112 : vector<1x128xf32>
    %115 = arith.addf %110, %114 : vector<1x128xf32>
    %116 = vector.extract_strided_slice %97 {offsets = [0, 3], sizes = [1, 1], strides = [1, 1]} : vector<1x4xf32> to vector<1x1xf32>
    %117 = vector.extract_strided_slice %96 {offsets = [3, 0], sizes = [1, 128], strides = [1, 1]} : vector<4x128xf32> to vector<1x128xf32>
    %118 = vector.broadcast %116 : vector<1x1xf32> to vector<1x128xf32>
    %119 = arith.mulf %118, %117 : vector<1x128xf32>
    %120 = arith.addf %115, %119 : vector<1x128xf32>
    %121 = arith.negf %120 : vector<1x128xf32>
    %122 = math.exp %121 : vector<1x128xf32>
    %cst_14 = arith.constant 1.000000e+00 : f32
    %123 = vector.broadcast %cst_14 : f32 to vector<1x128xf32>
    %124 = arith.addf %123, %122 : vector<1x128xf32>
    %125 = arith.divf %123, %124 : vector<1x128xf32>
    %c0_15 = arith.constant 0 : index
    %c0_16 = arith.constant 0 : index
    %126 = vector.load %arg8[%c0_15, %c0_16] : memref<1x128xf32, #tpu.memory_space<vmem>>, vector<1x128xf32>
    tpu.vector_store %arg8[%c0_15, %c0_16], %125 {strides = array<i32>} : memref<1x128xf32, #tpu.memory_space<vmem>>, vector<1x128xf32>,
    return
  }
  func.func @transform_0(%arg0: i32) -> (i32, i32) {
    %c0_i32 = arith.constant 0 : i32
    %c0_i32_0 = arith.constant 0 : i32
    return %c0_i32, %arg0 : i32, i32
  }
  func.func @transform_1(%arg0: i32) -> (i32, i32) {
    %c0_i32 = arith.constant 0 : i32
    %c0_i32_0 = arith.constant 0 : i32
    %c0_i32_1 = arith.constant 0 : i32
    return %c0_i32, %c0_i32_0 : i32, i32
  }
  func.func @transform_2(%arg0: i32) -> (i32, i32) {
    %c0_i32 = arith.constant 0 : i32
    %c0_i32_0 = arith.constant 0 : i32
    %c0_i32_1 = arith.constant 0 : i32
    return %c0_i32, %c0_i32_0 : i32, i32
  }
  func.func @transform_3(%arg0: i32) -> (i32, i32) {
    %c0_i32 = arith.constant 0 : i32
    %c0_i32_0 = arith.constant 0 : i32
    %c0_i32_1 = arith.constant 0 : i32
    return %c0_i32, %c0_i32_0 : i32, i32
  }
  func.func @transform_4(%arg0: i32) -> (i32, i32) {
    %c0_i32 = arith.constant 0 : i32
    %c0_i32_0 = arith.constant 0 : i32
    %c0_i32_1 = arith.constant 0 : i32
    return %c0_i32, %c0_i32_0 : i32, i32
  }
  func.func @transform_5(%arg0: i32) -> (i32, i32) {
    %c0_i32 = arith.constant 0 : i32
    %c0_i32_0 = arith.constant 0 : i32
    %c0_i32_1 = arith.constant 0 : i32
    return %c0_i32, %c0_i32_0 : i32, i32
  }
  func.func @transform_6(%arg0: i32) -> (i32, i32) {
    %c0_i32 = arith.constant 0 : i32
    %c0_i32_0 = arith.constant 0 : i32
    %c0_i32_1 = arith.constant 0 : i32
    return %c0_i32, %c0_i32_0 : i32, i32
  }
  func.func @transform_7(%arg0: i32) -> (i32, i32) {
    %c0_i32 = arith.constant 0 : i32
    %c0_i32_0 = arith.constant 0 : i32
    return %c0_i32, %arg0 : i32, i32
  }
}

</mosaic_0001>

<llo_original>
// kernel: tpu_custom_call.1
$region0: #{tpu_custom_call.1}
  #allocation0 [shape = 'u32[]', space=smem, size = 0x4, offset = 0x4, fixed_abs, tag = 'smem constant byte address 0x4 - core index']
  #allocation1 [shape = 'u32[144,128]{1,0:T(1,128)}', space=vmem, size = 0x12000, scoped, tag = 'internal scratch']
  #allocation2 [shape = 'f32[1,1]{1,0:T(1,128)S(1)}', space=vmem, size = 0x200, scoped, tag = 'scoped memory for tpu_custom_call.1']
  %s0 = inlined_call_operand.vmem [shape: f32[8,128], index: 0, kind: input, shape index: {}]
  %s1 = inlined_call_operand.vmem [shape: f32[6,8], index: 1, kind: input, shape index: {}]
  %s2 = inlined_call_operand.vmem [shape: f32[6,1], index: 2, kind: input, shape index: {}]
  %s3 = inlined_call_operand.vmem [shape: f32[4,6], index: 3, kind: input, shape index: {}]
  %s4 = inlined_call_operand.vmem [shape: f32[4,1], index: 4, kind: input, shape index: {}]
  %s5 = inlined_call_operand.vmem [shape: f32[1,4], index: 5, kind: input, shape index: {}]
  %s6 = inlined_call_operand.<no memory space> [shape: f32[1,1], index: 6, kind: input, shape index: {}]
  %s7 = inlined_call_operand.hbm [shape: f32[1,128], index: 7, kind: output, shape index: {}]
  %s8 = sld [smem:[#allocation0]]
  $region38: #{tpu_custom_call.1} parent=0
    _
  %s10 = ssub.s32 1, %s8
  %s11 = scalar_select 0, %s10, %s8
  %v12 = vstv %s6
  %13 = vst [vmem:[#allocation2] sm:$0x1] %v12
  $region1: #{tpu_custom_call.1} parent=0
    #allocation3 [shape = 'u8[512]{0}', space=vmem, size = 0x400, scoped, tag = 'output window, operand 0, single buffered']
    #allocation4 [shape = 's32[1]{0}', space=sflag, size = 0x4, scoped, tag = 'scoped memory for tpu_custom_call.1']
    %14 = vsyncpa [#allocation4], 0
    // Predicated region
    $region2: #{tpu_custom_call.1} parent=1 // pred_check
      _
    $region3: #{tpu_custom_call.1} parent=1 // pred_check_branch
      %16 = sbr.rel (0) target = $region5
    $region4: #{tpu_custom_call.1} parent=1 // pred_region
      _
    $region5: #{tpu_custom_call.1} parent=1 // pred_fallthru
      _
    // Predicated region
    $region6: #{tpu_custom_call.1} parent=1 // pred_check
      _
    $region7: #{tpu_custom_call.1} parent=1 // pred_check_branch
      %18 = sbr.rel (0) target = $region9
    $region8: #{tpu_custom_call.1} parent=1 // pred_region
      _
    $region9: #{tpu_custom_call.1} parent=1 // pred_fallthru
      _
    // Predicated region
    $region10: #{tpu_custom_call.1} parent=1 // pred_check
      _
    $region11: #{tpu_custom_call.1} parent=1 // pred_check_branch
      %20 = sbr.rel (0) target = $region13
    $region12: #{tpu_custom_call.1} parent=1 // pred_region
      _
    $region13: #{tpu_custom_call.1} parent=1 // pred_fallthru
      _
    // Predicated region
    $region14: #{tpu_custom_call.1} parent=1 // pred_check
      _
    $region15: #{tpu_custom_call.1} parent=1 // pred_check_branch
      %22 = sbr.rel (0) target = $region17
    $region16: #{tpu_custom_call.1} parent=1 // pred_region
      _
    $region17: #{tpu_custom_call.1} parent=1 // pred_fallthru
      _
    // Predicated region
    $region18: #{tpu_custom_call.1} parent=1 // pred_check
      _
    $region19: #{tpu_custom_call.1} parent=1 // pred_check_branch
      %24 = sbr.rel (0) target = $region21
    $region20: #{tpu_custom_call.1} parent=1 // pred_region
      _
    $region21: #{tpu_custom_call.1} parent=1 // pred_fallthru
      _
    // Predicated region
    $region22: #{tpu_custom_call.1} parent=1 // pred_check
      _
    $region23: #{tpu_custom_call.1} parent=1 // pred_check_branch
      %26 = sbr.rel (0) target = $region25
    $region24: #{tpu_custom_call.1} parent=1 // pred_region
      _
    $region25: #{tpu_custom_call.1} parent=1 // pred_fallthru
      _
    // Predicated region
    $region26: #{tpu_custom_call.1} parent=1 // pred_check
      _
    $region27: #{tpu_custom_call.1} parent=1 // pred_check_branch
      %28 = sbr.rel (0) target = $region29
    $region28: #{tpu_custom_call.1} parent=1 // pred_region
      _
    $region29: #{tpu_custom_call.1} parent=1 // pred_fallthru
      _
    %v29 = vld [vmem:[%s0] sm:$0xff]
    %v30 = vld [vmem:[%s1] sm:$0x3f]
    %v31 = vld [vmem:[%s2] sm:$0x3f]
    %33 = vset.pattern.permute.xlu0 0
    %34 = vperm.xlu0 %33, %v31
    %v35 = vpop.permute.xlu0 %34
    %38 = vset.pattern.permute.xlu0 0
    %39 = vperm.xlu0 %38, %v30
    %v40 = vpop.permute.xlu0 %39
    %v42 = vlaneseq
    %v43 = vshrl.u32 %v42, 7
    %v44 = vsub.s32 0, %v43
    %v45 = vrot.slane %v29, %v44
    %v46 = vmul.f32 %v40, %v45
    %v47 = vadd.f32 %v35, %v46
    %48 = vset.pattern.permute.xlu0 1
    %49 = vperm.xlu0 %48, %v30
    %v50 = vpop.permute.xlu0 %49
    %v52 = vlaneseq
    %v53 = vshrl.u32 %v52, 7
    %v54 = vsub.s32 1, %v53
    %v55 = vrot.slane %v29, %v54
    %v56 = vmul.f32 %v50, %v55
    %v57 = vadd.f32 %v47, %v56
    %58 = vset.pattern.permute.xlu0 2
    %59 = vperm.xlu0 %58, %v30
    %v60 = vpop.permute.xlu0 %59
    %v62 = vlaneseq
    %v63 = vshrl.u32 %v62, 7
    %v64 = vsub.s32 2, %v63
    %v65 = vrot.slane %v29, %v64
    %v66 = vmul.f32 %v60, %v65
    %v67 = vadd.f32 %v57, %v66
    %68 = vset.pattern.permute.xlu0 3
    %69 = vperm.xlu0 %68, %v30
    %v70 = vpop.permute.xlu0 %69
    %v72 = vlaneseq
    %v73 = vshrl.u32 %v72, 7
    %v74 = vsub.s32 3, %v73
    %v75 = vrot.slane %v29, %v74
    %v76 = vmul.f32 %v70, %v75
    %v77 = vadd.f32 %v67, %v76
    %78 = vset.pattern.permute.xlu0 4
    %79 = vperm.xlu0 %78, %v30
    %v80 = vpop.permute.xlu0 %79
    %v82 = vlaneseq
    %v83 = vshrl.u32 %v82, 7
    %v84 = vsub.s32 4, %v83
    %v85 = vrot.slane %v29, %v84
    %v86 = vmul.f32 %v80, %v85
    %v87 = vadd.f32 %v77, %v86
    %88 = vset.pattern.permute.xlu0 5
    %89 = vperm.xlu0 %88, %v30
    %v90 = vpop.permute.xlu0 %89
    %v92 = vlaneseq
    %v93 = vshrl.u32 %v92, 7
    %v94 = vsub.s32 5, %v93
    %v95 = vrot.slane %v29, %v94
    %v96 = vmul.f32 %v90, %v95
    %v97 = vadd.f32 %v87, %v96
    %98 = vset.pattern.permute.xlu0 6
    %99 = vperm.xlu0 %98, %v30
    %v100 = vpop.permute.xlu0 %99
    %v102 = vlaneseq
    %v103 = vshrl.u32 %v102, 7
    %v104 = vsub.s32 6, %v103
    %v105 = vrot.slane %v29, %v104
    %v106 = vmul.f32 %v100, %v105
    %v107 = vadd.f32 %v97, %v106
    %108 = vset.pattern.permute.xlu0 7
    %109 = vperm.xlu0 %108, %v30
    %v110 = vpop.permute.xlu0 %109
    %v112 = vlaneseq
    %v113 = vshrl.u32 %v112, 7
    %v114 = vsub.s32 7, %v113
    %v115 = vrot.slane %v29, %v114
    %v116 = vmul.f32 %v110, %v115
    %v117 = vadd.f32 %v107, %v116
    %v118 = vmax.f32 %v117, 0.0
    %v119 = vld [vmem:[%s3] sm:$0xf]
    %v120 = vld [vmem:[%s4] sm:$0xf]
    %122 = vset.pattern.permute.xlu0 0
    %123 = vperm.xlu0 %122, %v120
    %v124 = vpop.permute.xlu0 %123
    %127 = vset.pattern.permute.xlu0 0
    %128 = vperm.xlu0 %127, %v119
    %v129 = vpop.permute.xlu0 %128
    %v131 = vlaneseq
    %v132 = vshrl.u32 %v131, 7
    %v133 = vsub.s32 0, %v132
    %v134 = vrot.slane %v118, %v133
    %v135 = vmul.f32 %v129, %v134
    %v136 = vadd.f32 %v124, %v135
    %137 = vset.pattern.permute.xlu0 1
    %138 = vperm.xlu0 %137, %v119
    %v139 = vpop.permute.xlu0 %138
    %v141 = vlaneseq
    %v142 = vshrl.u32 %v141, 7
    %v143 = vsub.s32 1, %v142
    %v144 = vrot.slane %v118, %v143
    %v145 = vmul.f32 %v139, %v144
    %v146 = vadd.f32 %v136, %v145
    %147 = vset.pattern.permute.xlu0 2
    %148 = vperm.xlu0 %147, %v119
    %v149 = vpop.permute.xlu0 %148
    %v151 = vlaneseq
    %v152 = vshrl.u32 %v151, 7
    %v153 = vsub.s32 2, %v152
    %v154 = vrot.slane %v118, %v153
    %v155 = vmul.f32 %v149, %v154
    %v156 = vadd.f32 %v146, %v155
    %157 = vset.pattern.permute.xlu0 3
    %158 = vperm.xlu0 %157, %v119
    %v159 = vpop.permute.xlu0 %158
    %v161 = vlaneseq
    %v162 = vshrl.u32 %v161, 7
    %v163 = vsub.s32 3, %v162
    %v164 = vrot.slane %v118, %v163
    %v165 = vmul.f32 %v159, %v164
    %v166 = vadd.f32 %v156, %v165
    %167 = vset.pattern.permute.xlu0 4
    %168 = vperm.xlu0 %167, %v119
    %v169 = vpop.permute.xlu0 %168
    %v171 = vlaneseq
    %v172 = vshrl.u32 %v171, 7
    %v173 = vsub.s32 4, %v172
    %v174 = vrot.slane %v118, %v173
    %v175 = vmul.f32 %v169, %v174
    %v176 = vadd.f32 %v166, %v175
    %177 = vset.pattern.permute.xlu0 5
    %178 = vperm.xlu0 %177, %v119
    %v179 = vpop.permute.xlu0 %178
    %v181 = vlaneseq
    %v182 = vshrl.u32 %v181, 7
    %v183 = vsub.s32 5, %v182
    %v184 = vrot.slane %v118, %v183
    %v185 = vmul.f32 %v179, %v184
    %v186 = vadd.f32 %v176, %v185
    %v187 = vmax.f32 %v186, 0.0
    %v188 = vld [vmem:[%s5] sm:$0x1]
    %v189 = vld [vmem:[#allocation2] sm:$0x1]
    %191 = vset.pattern.permute.xlu0 0
    %192 = vperm.xlu0 %191, %v189
    %v193 = vpop.permute.xlu0 %192
    %v195 = vlaneseq
    %v196 = vshrl.u32 %v195, 7
    %v197 = vsub.s32 0, %v196
    %v198 = vrot.slane %v193, %v197
    %200 = vset.pattern.permute.xlu0 0
    %201 = vperm.xlu0 %200, %v188
    %v202 = vpop.permute.xlu0 %201
    %v204 = vlaneseq
    %v205 = vshrl.u32 %v204, 7
    %v206 = vsub.s32 0, %v205
    %v207 = vrot.slane %v202, %v206
    %v208 = vmul.f32 %v207, %v187
    %v209 = vadd.f32 %v198, %v208
    %210 = vset.pattern.permute.xlu0 1
    %211 = vperm.xlu0 %210, %v188
    %v212 = vpop.permute.xlu0 %211
    %v214 = vlaneseq
    %v215 = vshrl.u32 %v214, 7
    %v216 = vsub.s32 0, %v215
    %v217 = vrot.slane %v212, %v216
    %v218 = vmul.f32 %v217, %v187
    %v220 = vrot.slane %v218, 1
    %v222 = vadd.f32 %v209, %v220
    %223 = vset.pattern.permute.xlu0 2
    %224 = vperm.xlu0 %223, %v188
    %v225 = vpop.permute.xlu0 %224
    %v227 = vlaneseq
    %v228 = vshrl.u32 %v227, 7
    %v229 = vsub.s32 0, %v228
    %v230 = vrot.slane %v225, %v229
    %v231 = vmul.f32 %v230, %v187
    %v233 = vrot.slane %v231, 2
    %v235 = vadd.f32 %v222, %v233
    %236 = vset.pattern.permute.xlu0 3
    %237 = vperm.xlu0 %236, %v188
    %v238 = vpop.permute.xlu0 %237
    %v240 = vlaneseq
    %v241 = vshrl.u32 %v240, 7
    %v242 = vsub.s32 0, %v241
    %v243 = vrot.slane %v238, %v242
    %v244 = vmul.f32 %v243, %v187
    %v246 = vrot.slane %v244, 3
    %v248 = vadd.f32 %v235, %v246
    %v249 = vxor.u32 %v248, 2147483648
    %v250 = vmul.f32 %v249, 1.442695
    %v251 = vpow.pop %v250
    %v252 = vadd.f32 %v251, 1.0
    %v253 = vrcp.pop %v252
    %v254 = vmul.f32 1.0, %v253
    %255 = vst [vmem:[#allocation3] sm:$0x1] %v254
    // Predicated region
    $region30: #{tpu_custom_call.1} parent=1 // pred_check
      _
    $region31: #{tpu_custom_call.1} parent=1 // pred_check_branch
      %257 = sbr.rel (0) target = $region33
    $region32: #{tpu_custom_call.1} parent=1 // pred_region
      %s259 = ssub.s32 16, 16
      %260 = vsyncadd [#allocation4], %s259
      %s262 = sshll.u32 [#allocation3], 4
      %s263 = int_to_ptr.vmem [resolvable:$true] %s262
      %265 = dma.vmem_to_hbm [thread:$0]  %s263, 16, %s7, [#allocation4]
    $region33: #{tpu_custom_call.1} parent=1 // pred_fallthru
      _
    // Predicated region
    $region34: #{tpu_custom_call.1} parent=1 // pred_check
      _
    $region35: #{tpu_custom_call.1} parent=1 // pred_check_branch
      %267 = sbr.rel (0) target = $region37
    $region36: #{tpu_custom_call.1} parent=1 // pred_region
      %268 = dma.done [#allocation4], 16
    $region37: #{tpu_custom_call.1} parent=1 // pred_fallthru
      _
    %269 = vsyncpa [#allocation4], 1

</llo_original>
